<compile_context>
chip_gen: v6e
topology: v6e:2x2x1
jax: 0.10.0
libtpu: 0.0.40
codegen_flags: <defaults>
</compile_context>

<pallas_src>
import functools

import jax
import jax.numpy as jnp
from jax.experimental import pallas as pl
from jax.experimental.pallas import tpu as pltpu


# ----------------------------------------------------------------------------
# VMEM budgeting (v7x has 64 MiB physical; keep resident-weight GEMMs <= ~40 MiB
# including double buffers, request a 48 MiB scoped limit explicitly).
# ----------------------------------------------------------------------------
_VMEM_BUDGET = 40 * 1024 * 1024
_VMEM_LIMIT = 48 * 1024 * 1024


def _pick_tile(dim, target, align):
    """Largest divisor of `dim` that is <= target and a multiple of `align`.

    Falls back to the full dimension (always a legal block shape) only when no
    aligned divisor exists, instead of silently using a huge block for any
    non-divisible dim.
    """
    if dim <= target:
        return dim
    t = (target // align) * align
    while t >= align:
        if dim % t == 0:
            return t
        t -= align
    return dim


def _gemm_vmem_bytes(tm, K, N, *, residual=False, n_vecs=1):
    """Conservative VMEM estimate for the resident-weight GEMM (double-buffered)."""
    bf = 2  # bf16
    w = 2 * K * N * bf                       # resident weight (double-buffered alloc)
    x = 2 * tm * K * bf
    o = 2 * tm * N * bf
    r = 2 * tm * N * bf if residual else 0
    v = 2 * n_vecs * N * 4                   # bias / gamma / beta rows
    return w + x + o + r + v


# ----------------------------------------------------------------------------
# GEMM (+ optional activation):  y = act(x @ W + b)
#   x: (M, K) bf16, W: (K, N) bf16 (pre-transposed), b: (1, N) f32 -> y bf16
# Resident-weight path: grid over M only, W DMA'd once, no K loop.
# ----------------------------------------------------------------------------
def _apply_act(y, activation):
    if activation == "tanh":
        return jnp.tanh(y)
    if activation == "gelu":
        # exact (erf-based) GELU as used by BERT / tbert
        return y * 0.5 * (1.0 + jax.lax.erf(y * 0.7071067811865476))
    return y


def _linear_act_res_kernel(x_ref, w_ref, b_ref, o_ref, *, activation):
    y = jnp.dot(x_ref[...], w_ref[...],
                preferred_element_type=jnp.float32) + b_ref[...]
    o_ref[...] = _apply_act(y, activation).astype(o_ref.dtype)


def _linear_act_tiled_kernel(x_ref, w_ref, b_ref, o_ref, acc_ref, *, activation):
    k = pl.program_id(2)

    @pl.when(k == 0)
    def _():
        acc_ref[...] = jnp.zeros_like(acc_ref)

    acc_ref[...] += jnp.dot(x_ref[...], w_ref[...],
                            preferred_element_type=jnp.float32)

    @pl.when(k == pl.num_programs(2) - 1)
    def _():
        y = acc_ref[...] + b_ref[...]
        o_ref[...] = _apply_act(y, activation).astype(o_ref.dtype)


def linear_act(x, w, b, activation=None):
    M, K = x.shape
    _, N = w.shape
    tm = _pick_tile(M, 512, 8)

    if _gemm_vmem_bytes(tm, K, N, n_vecs=1) <= _VMEM_BUDGET:
        return pl.pallas_call(
            functools.partial(_linear_act_res_kernel, activation=activation),
            out_shape=jax.ShapeDtypeStruct((M, N), jnp.bfloat16),
            grid=(M // tm,),
            in_specs=[
                pl.BlockSpec((tm, K), lambda i: (i, 0)),   # x
                pl.BlockSpec((K, N), lambda i: (0, 0)),    # W resident
                pl.BlockSpec((1, N), lambda i: (0, 0)),    # bias
            ],
            out_specs=pl.BlockSpec((tm, N), lambda i: (i, 0)),
            compiler_params=pltpu.CompilerParams(
                dimension_semantics=("parallel",),
                vmem_limit_bytes=_VMEM_LIMIT),
        )(x, w, b)

    # fallback: (M, N, K) tiled with f32 accumulator (weight too big for VMEM)
    tn = _pick_tile(N, 1024, 128)
    tk = _pick_tile(K, 1024, 128)
    return pl.pallas_call(
        functools.partial(_linear_act_tiled_kernel, activation=activation),
        out_shape=jax.ShapeDtypeStruct((M, N), jnp.bfloat16),
        grid_spec=pltpu.PrefetchScalarGridSpec(
            num_scalar_prefetch=0,
            grid=(M // tm, N // tn, K // tk),
            in_specs=[
                pl.BlockSpec((tm, tk), lambda i, j, k: (i, k)),
                pl.BlockSpec((tk, tn), lambda i, j, k: (k, j)),
                pl.BlockSpec((1, tn), lambda i, j, k: (0, j)),
            ],
            out_specs=pl.BlockSpec((tm, tn), lambda i, j, k: (i, j)),
            scratch_shapes=[pltpu.VMEM((tm, tn), jnp.float32)],
        ),
        compiler_params=pltpu.CompilerParams(
            dimension_semantics=("parallel", "parallel", "arbitrary"),
            vmem_limit_bytes=_VMEM_LIMIT),
    )(x, w, b)


# ----------------------------------------------------------------------------
# GEMM with fused residual-add + LayerNorm epilogue:
#   y = LayerNorm(x @ W + b + residual) * gamma + beta
#   (N == hidden stays whole so the LN reduction sees the full row)
# Resident-weight path removes both the K loop and the per-M weight re-fetch.
# ----------------------------------------------------------------------------
def _res_ln_epilogue(y, g, b, o_ref):
    mu = jnp.mean(y, axis=-1, keepdims=True)
    var = jnp.mean((y - mu) * (y - mu), axis=-1, keepdims=True)
    yn = (y - mu) * jax.lax.rsqrt(var + 1e-12)
    o_ref[...] = (yn * g + b).astype(o_ref.dtype)


def _linear_res_ln_res_kernel(x_ref, w_ref, b_ref, res_ref, g_ref, bln_ref, o_ref):
    y = (jnp.dot(x_ref[...], w_ref[...], preferred_element_type=jnp.float32)
         + b_ref[...] + res_ref[...].astype(jnp.float32))
    _res_ln_epilogue(y, g_ref[...], bln_ref[...], o_ref)


def _linear_res_ln_tiled_kernel(x_ref, w_ref, b_ref, res_ref, g_ref, bln_ref,
                                o_ref, acc_ref):
    k = pl.program_id(1)

    @pl.when(k == 0)
    def _():
        acc_ref[...] = jnp.zeros_like(acc_ref)

    acc_ref[...] += jnp.dot(x_ref[...], w_ref[...],
                            preferred_element_type=jnp.float32)

    @pl.when(k == pl.num_programs(1) - 1)
    def _():
        y = acc_ref[...] + b_ref[...] + res_ref[...].astype(jnp.float32)
        _res_ln_epilogue(y, g_ref[...], bln_ref[...], o_ref)


def linear_res_ln(x, w, b, residual, gamma, beta):
    M, K = x.shape
    _, N = w.shape
    tm = _pick_tile(M, 512, 8)

    if _gemm_vmem_bytes(tm, K, N, residual=True, n_vecs=3) <= _VMEM_BUDGET:
        return pl.pallas_call(
            _linear_res_ln_res_kernel,
            out_shape=jax.ShapeDtypeStruct((M, N), jnp.bfloat16),
            grid=(M // tm,),
            in_specs=[
                pl.BlockSpec((tm, K), lambda i: (i, 0)),   # x
                pl.BlockSpec((K, N), lambda i: (0, 0)),    # W resident
                pl.BlockSpec((1, N), lambda i: (0, 0)),    # bias
                pl.BlockSpec((tm, N), lambda i: (i, 0)),   # residual
                pl.BlockSpec((1, N), lambda i: (0, 0)),    # gamma
                pl.BlockSpec((1, N), lambda i: (0, 0)),    # beta
            ],
            out_specs=pl.BlockSpec((tm, N), lambda i: (i, 0)),
            compiler_params=pltpu.CompilerParams(
                dimension_semantics=("parallel",),
                vmem_limit_bytes=_VMEM_LIMIT),
        )(x, w, b, residual, gamma, beta)

    # fallback: K-tiled with f32 accumulator (weight too big for VMEM)
    tk = _pick_tile(K, 1024, 128)
    return pl.pallas_call(
        _linear_res_ln_tiled_kernel,
        out_shape=jax.ShapeDtypeStruct((M, N), jnp.bfloat16),
        grid_spec=pltpu.PrefetchScalarGridSpec(
            num_scalar_prefetch=0,
            grid=(M // tm, K // tk),
            in_specs=[
                pl.BlockSpec((tm, tk), lambda i, k: (i, k)),
                pl.BlockSpec((tk, N), lambda i, k: (k, 0)),
                pl.BlockSpec((1, N), lambda i, k: (0, 0)),
                pl.BlockSpec((tm, N), lambda i, k: (i, 0)),
                pl.BlockSpec((1, N), lambda i, k: (0, 0)),
                pl.BlockSpec((1, N), lambda i, k: (0, 0)),
            ],
            out_specs=pl.BlockSpec((tm, N), lambda i, k: (i, 0)),
            scratch_shapes=[pltpu.VMEM((tm, N), jnp.float32)],
        ),
        compiler_params=pltpu.CompilerParams(
            dimension_semantics=("parallel", "arbitrary"),
            vmem_limit_bytes=_VMEM_LIMIT),
    )(x, w, b, residual, gamma, beta)


# ----------------------------------------------------------------------------
# fused embedding sum (word + type + pos) + LayerNorm
# ----------------------------------------------------------------------------
def _emb_ln_kernel(wg_ref, tg_ref, pos_ref, g_ref, b_ref, o_ref):
    x = (wg_ref[0].astype(jnp.float32)
         + tg_ref[0].astype(jnp.float32)
         + pos_ref[...].astype(jnp.float32))
    mu = jnp.mean(x, axis=-1, keepdims=True)
    var = jnp.mean((x - mu) * (x - mu), axis=-1, keepdims=True)
    xn = (x - mu) * jax.lax.rsqrt(var + 1e-12)
    o_ref[0] = (xn * g_ref[...] + b_ref[...]).astype(o_ref.dtype)


def embed_layernorm(word_g, type_g, pos, gamma, beta):
    B, S, H = word_g.shape
    return pl.pallas_call(
        _emb_ln_kernel,
        out_shape=jax.ShapeDtypeStruct((B, S, H), jnp.bfloat16),
        grid=(B,),
        in_specs=[
            pl.BlockSpec((1, S, H), lambda b: (b, 0, 0)),
            pl.BlockSpec((1, S, H), lambda b: (b, 0, 0)),
            pl.BlockSpec((S, H), lambda b: (0, 0)),
            pl.BlockSpec((1, H), lambda b: (0, 0)),
            pl.BlockSpec((1, H), lambda b: (0, 0)),
        ],
        out_specs=pl.BlockSpec((1, S, H), lambda b: (b, 0, 0)),
        compiler_params=pltpu.CompilerParams(dimension_semantics=("parallel",)),
    )(word_g, type_g, pos, gamma, beta)


# ----------------------------------------------------------------------------
# fused QKV projection + multi-head self-attention.
# One batch per grid step; W_qkv VMEM-resident (DMA'd once); heads processed in
# pairs with direct per-pair stores (2*dh = 128 lanes for dh=64).  Scale is
# folded into q, softmax normalization deferred until after the PV matmul.
# ----------------------------------------------------------------------------
def _attn_kernel(h_ref, wqkv_ref, bqkv_ref, mask_ref, o_ref, *, nh, dh, scale):
    x = h_ref[0]                                        # (S, H) bf16
    qkv = (jnp.dot(x, wqkv_ref[...], preferred_element_type=jnp.float32)
           + bqkv_ref[...]).astype(jnp.bfloat16)        # (S, 3H) bf16
    mask = mask_ref[...]                                # (1, S) f32 additive mask
    H = nh * dh

    def head_ctx(hh):
        q = qkv[:, hh * dh:(hh + 1) * dh] * scale                 # scale folded in
        kk = qkv[:, H + hh * dh:H + (hh + 1) * dh]
        v = qkv[:, 2 * H + hh * dh:2 * H + (hh + 1) * dh]
        # contract on head_dim of both operands -> no transpose of K
        s = jax.lax.dot_general(q, kk, (((1,), (1,)), ((), ())),
                                preferred_element_type=jnp.float32)
        s = s + mask
        e = jnp.exp(s - jnp.max(s, axis=-1, keepdims=True))
        # attention-probs dropout is identity in eval mode
        ctx = jnp.dot(e.astype(v.dtype), v, preferred_element_type=jnp.float32)
        # deferred normalization: scale (S, dh) instead of (S, S)
        return ctx * pl.reciprocal(jnp.sum(e, axis=-1, keepdims=True), approx=True)

    for p in range(nh // 2):                     # head pairs -> lane-aligned stores
        c0 = 2 * p * dh
        pair = jnp.concatenate([head_ctx(2 * p), head_ctx(2 * p + 1)], axis=-1)
        o_ref[0, :, c0:c0 + 2 * dh] = pair.astype(o_ref.dtype)
    if nh % 2:
        hh = nh - 1
        o_ref[0, :, hh * dh:(hh + 1) * dh] = head_ctx(hh).astype(o_ref.dtype)


def attention(h, wqkv, bqkv, mask_add, nh, dh):
    B, S, H = h.shape
    threeH = 3 * H
    scale = 1.0 / (dh ** 0.5)
    return pl.pallas_call(
        functools.partial(_attn_kernel, nh=nh, dh=dh, scale=scale),
        out_shape=jax.ShapeDtypeStruct((B, S, H), jnp.bfloat16),
        grid=(B,),
        in_specs=[
            pl.BlockSpec((1, S, H), lambda b: (b, 0, 0)),     # hidden states
            pl.BlockSpec((H, threeH), lambda b: (0, 0)),      # resident W_qkv
            pl.BlockSpec((1, threeH), lambda b: (0, 0)),      # qkv bias
            pl.BlockSpec((1, S), lambda b: (b, 0)),           # mask (shared by heads)
        ],
        out_specs=pl.BlockSpec((1, S, H), lambda b: (b, 0, 0)),
        compiler_params=pltpu.CompilerParams(
            dimension_semantics=("parallel",),
            vmem_limit_bytes=_VMEM_LIMIT),
    )(h, wqkv, bqkv, mask_add)


# ----------------------------------------------------------------------------
# fused pooler (tanh) + classifier head (tiny; single kernel launch)
# ----------------------------------------------------------------------------
def _head_kernel(cls_ref, wp_ref, bp_ref, wc_ref, bc_ref, o_ref):
    x = cls_ref[...]
    pooled = jnp.tanh(jnp.dot(x, wp_ref[...],
                              preferred_element_type=jnp.float32) + bp_ref[...])
    logits = jnp.dot(pooled.astype(wc_ref.dtype), wc_ref[...],
                     preferred_element_type=jnp.float32) + bc_ref[...]
    # trailing classifier dropout is identity in eval mode
    o_ref[...] = logits


def pooler_classifier(cls, wp, bp, wc, bc):
    B, H = cls.shape
    C = wc.shape[1]
    return pl.pallas_call(
        _head_kernel,
        out_shape=jax.ShapeDtypeStruct((B, C), jnp.float32),
        grid=(1,),
        in_specs=[
            pl.BlockSpec((B, H), lambda i: (0, 0)),
            pl.BlockSpec((H, H), lambda i: (0, 0)),
            pl.BlockSpec((1, H), lambda i: (0, 0)),
            pl.BlockSpec((H, C), lambda i: (0, 0)),
            pl.BlockSpec((1, C), lambda i: (0, 0)),
        ],
        out_specs=pl.BlockSpec((B, C), lambda i: (0, 0)),
    )(cls, wp, bp, wc, bc)


# ----------------------------------------------------------------------------
# Parameter construction.
# Weights N(0, initializer_range), biases 0 (matches init_linear); stored
# pre-transposed as (in_features, out_features) in bf16, biases f32 (1, N).
# ----------------------------------------------------------------------------
def make_params(key, config, num_classes):
    H = config["hidden_size"]
    I = config["intermediate_size"]
    V = config["vocab_size"]
    P = config["max_position_embeddings"]
    T = config["type_vocab_size"]
    L = config["num_hidden_layers"]
    s = config["initializer_range"]

    keys = iter(jax.random.split(key, 8 + 4 * L))

    def nrm(shape):
        return (s * jax.random.normal(next(keys), shape, jnp.float32)
                ).astype(jnp.bfloat16)

    zeros = lambda n: jnp.zeros((1, n), jnp.float32)
    ones = lambda n: jnp.ones((1, n), jnp.float32)

    params = {
        "word_emb": nrm((V, H)),
        "pos_emb": nrm((P, H)),
        "type_emb": nrm((T, H)),
        "emb_ln_g": ones(H), "emb_ln_b": zeros(H),
        "pooler_w": nrm((H, H)), "pooler_b": zeros(H),
        "cls_w": nrm((H, num_classes)), "cls_b": zeros(num_classes),
        "layers": [],
    }
    for _ in range(L):
        params["layers"].append({
            # fused wq|wk|wv, pre-transposed to (H, 3H)
            "wqkv": nrm((H, 3 * H)), "bqkv": zeros(3 * H),
            "wo": nrm((H, H)), "bo": zeros(H),
            "ln1_g": ones(H), "ln1_b": zeros(H),
            "wi": nrm((H, I)), "bi": zeros(I),
            "wo2": nrm((I, H)), "bo2": zeros(H),
            "ln2_g": ones(H), "ln2_b": zeros(H),
        })
    return params


# ----------------------------------------------------------------------------
# Forward pass (embedding gathers / reshapes are XLA glue; hot paths in Pallas)
# ----------------------------------------------------------------------------
def bert_classifier_forward(params, config, input_ids, input_type_ids, input_mask):
    B, S = input_ids.shape
    H = config["hidden_size"]
    nh = config["num_attention_heads"]
    dh = H // nh

    # --- embeddings: gather (glue), fused add + LayerNorm in Pallas ---
    # TODO(synk): embedding gather stays in XLA (data-dependent row gather).
    word_g = jnp.take(params["word_emb"], input_ids, axis=0)        # (B,S,H)
    type_g = jnp.take(params["type_emb"], input_type_ids, axis=0)   # (B,S,H)
    pos = params["pos_emb"][:S]                                      # (S,H)
    h = embed_layernorm(word_g, type_g, pos,
                        params["emb_ln_g"], params["emb_ln_b"])      # (B,S,H) bf16
    # embedding dropout: identity in eval mode

    # additive attention mask over key positions, shared by all heads
    mask_add = (1.0 - input_mask.astype(jnp.float32)) * -10000.0     # (B,S)

    h2 = h.reshape(B * S, H)
    for lp in params["layers"]:
        # --- self-attention: QKV projection fused into the attention kernel ---
        ctx = attention(h2.reshape(B, S, H), lp["wqkv"], lp["bqkv"],
                        mask_add, nh, dh)                             # (B,S,H)
        # output projection with fused residual + LayerNorm epilogue
        h2 = linear_res_ln(ctx.reshape(B * S, H), lp["wo"], lp["bo"],
                           h2, lp["ln1_g"], lp["ln1_b"])

        # --- feed-forward: GEMM+GELU, then GEMM with fused residual + LN ---
        inter = linear_act(h2, lp["wi"], lp["bi"], activation="gelu")  # (B*S, I)
        h2 = linear_res_ln(inter, lp["wo2"], lp["bo2"],
                           h2, lp["ln2_g"], lp["ln2_b"])

    # --- pooler ([CLS] -> dense -> tanh) + classifier head, fused ---
    cls = h2.reshape(B, S, H)[:, 0, :]                                # (B, H)
    logits = pooler_classifier(cls, params["pooler_w"], params["pooler_b"],
                               params["cls_w"], params["cls_b"])      # (B, C) f32
    return logits


# ----------------------------------------------------------------------------
if __name__ == "__main__":
    config = {
        "vocab_size": 64,
        "hidden_size": 32,
        "num_hidden_layers": 2,
        "num_attention_heads": 2,
        "intermediate_size": 64,
        "max_position_embeddings": 32,
        "type_vocab_size": 2,
        "hidden_dropout_prob": 0.1,
        "attention_probs_dropout_prob": 0.1,
        "initializer_range": 0.02,
    }
    num_classes = 3
    B, S = 2, 8

    root = jax.random.PRNGKey(0)
    k_params, k_ids, k_types = jax.random.split(root, 3)

    params = make_params(k_params, config, num_classes)

    input_ids = jax.random.randint(k_ids, (B, S), 0, config["vocab_size"], jnp.int32)
    input_type_ids = jax.random.randint(k_types, (B, S), 0,
                                        config["type_vocab_size"], jnp.int32)
    # mask: batch 0 fully valid, batch 1 has last two positions padded
    input_mask = jnp.array([[1] * S, [1] * (S - 2) + [0, 0]], jnp.int32)

    logits = bert_classifier_forward(params, config, input_ids,
                                     input_type_ids, input_mask)
    logits = jax.block_until_ready(logits)

    assert logits.shape == (B, num_classes)
    assert logits.dtype == jnp.float32
    assert bool(jnp.all(jnp.isfinite(logits)))
    print("KERNEL_OK")
</pallas_src>

<mosaic_0001>
module attributes {stable_mosaic.version = 11 : i64} {
  func.func @_emb_ln_kernel(%arg0: i32, %arg1: memref<1x8x32xbf16, #tpu.memory_space<vmem>>, %arg2: memref<1x8x32xbf16, #tpu.memory_space<vmem>>, %arg3: memref<8x32xbf16, #tpu.memory_space<vmem>>, %arg4: memref<1x32xf32, #tpu.memory_space<vmem>>, %arg5: memref<1x32xf32, #tpu.memory_space<vmem>>, %arg6: memref<1x8x32xbf16, #tpu.memory_space<vmem>>) attributes {dimension_semantics = [#tpu.dimension_semantics<parallel>], iteration_bounds = array<i64: 2>, scalar_prefetch = 0 : i64, scratch_operands = 0 : i64, tpu.core_type = #tpu.core_type<tc>, window_params = [{transform_indices = @transform_0, window_bounds = array<i64: 1, 8, 32>}, {transform_indices = @transform_1, window_bounds = array<i64: 1, 8, 32>}, {pipeline_mode = #tpu.pipeline_mode<synchronous>, transform_indices = @transform_2, window_bounds = array<i64: 8, 32>}, {pipeline_mode = #tpu.pipeline_mode<synchronous>, transform_indices = @transform_3, window_bounds = array<i64: 1, 32>}, {pipeline_mode = #tpu.pipeline_mode<synchronous>, transform_indices = @transform_4, window_bounds = array<i64: 1, 32>}, {transform_indices = @transform_5, window_bounds = array<i64: 1, 8, 32>}]} {
    %c0 = arith.constant 0 : index
    %c0_0 = arith.constant 0 : index
    %c0_1 = arith.constant 0 : index
    %0 = vector.load %arg1[%c0, %c0_0, %c0_1] : memref<1x8x32xbf16, #tpu.memory_space<vmem>>, vector<1x8x32xbf16>
    %1 = vector.shape_cast %0 : vector<1x8x32xbf16> to vector<8x32xbf16>
    %2 = arith.extf %1 : vector<8x32xbf16> to vector<8x32xf32>
    %c0_2 = arith.constant 0 : index
    %c0_3 = arith.constant 0 : index
    %c0_4 = arith.constant 0 : index
    %3 = vector.load %arg2[%c0_2, %c0_3, %c0_4] : memref<1x8x32xbf16, #tpu.memory_space<vmem>>, vector<1x8x32xbf16>
    %4 = vector.shape_cast %3 : vector<1x8x32xbf16> to vector<8x32xbf16>
    %5 = arith.extf %4 : vector<8x32xbf16> to vector<8x32xf32>
    %6 = arith.addf %2, %5 : vector<8x32xf32>
    %c0_5 = arith.constant 0 : index
    %c0_6 = arith.constant 0 : index
    %7 = vector.load %arg3[%c0_5, %c0_6] : memref<8x32xbf16, #tpu.memory_space<vmem>>, vector<8x32xbf16>
    %8 = arith.extf %7 : vector<8x32xbf16> to vector<8x32xf32>
    %9 = arith.addf %6, %8 : vector<8x32xf32>
    %cst = arith.constant dense<0.000000e+00> : vector<8xf32>
    %10 = vector.multi_reduction <add>, %9, %cst [1] : vector<8x32xf32> to vector<8xf32>
    %11 = vector.shape_cast %10 : vector<8xf32> to vector<8x1xf32>
    %cst_7 = arith.constant 3.200000e+01 : f32
    %12 = vector.broadcast %cst_7 : f32 to vector<8x1xf32>
    %13 = arith.divf %11, %12 : vector<8x1xf32>
    %14 = vector.broadcast %13 : vector<8x1xf32> to vector<8x32xf32>
    %15 = arith.subf %9, %14 : vector<8x32xf32>
    %16 = vector.broadcast %13 : vector<8x1xf32> to vector<8x32xf32>
    %17 = arith.subf %9, %16 : vector<8x32xf32>
    %18 = arith.mulf %15, %17 : vector<8x32xf32>
    %cst_8 = arith.constant dense<0.000000e+00> : vector<8xf32>
    %19 = vector.multi_reduction <add>, %18, %cst_8 [1] : vector<8x32xf32> to vector<8xf32>
    %20 = vector.shape_cast %19 : vector<8xf32> to vector<8x1xf32>
    %cst_9 = arith.constant 3.200000e+01 : f32
    %21 = vector.broadcast %cst_9 : f32 to vector<8x1xf32>
    %22 = arith.divf %20, %21 : vector<8x1xf32>
    %23 = vector.broadcast %13 : vector<8x1xf32> to vector<8x32xf32>
    %24 = arith.subf %9, %23 : vector<8x32xf32>
    %cst_10 = arith.constant 9.99999996E-13 : f32
    %25 = vector.broadcast %cst_10 : f32 to vector<8x1xf32>
    %26 = arith.addf %22, %25 : vector<8x1xf32>
    %27 = math.rsqrt %26 : vector<8x1xf32>
    %28 = vector.broadcast %27 : vector<8x1xf32> to vector<8x32xf32>
    %29 = arith.mulf %24, %28 : vector<8x32xf32>
    %c0_11 = arith.constant 0 : index
    %c0_12 = arith.constant 0 : index
    %30 = vector.load %arg4[%c0_11, %c0_12] : memref<1x32xf32, #tpu.memory_space<vmem>>, vector<1x32xf32>
    %31 = vector.broadcast %30 : vector<1x32xf32> to vector<8x32xf32>
    %32 = arith.mulf %29, %31 : vector<8x32xf32>
    %c0_13 = arith.constant 0 : index
    %c0_14 = arith.constant 0 : index
    %33 = vector.load %arg5[%c0_13, %c0_14] : memref<1x32xf32, #tpu.memory_space<vmem>>, vector<1x32xf32>
    %34 = vector.broadcast %33 : vector<1x32xf32> to vector<8x32xf32>
    %35 = arith.addf %32, %34 : vector<8x32xf32>
    %36 = arith.truncf %35 : vector<8x32xf32> to vector<8x32xbf16>
    %c0_15 = arith.constant 0 : index
    %c0_16 = arith.constant 0 : index
    %c0_17 = arith.constant 0 : index
    %37 = vector.load %arg6[%c0_15, %c0_16, %c0_17] : memref<1x8x32xbf16, #tpu.memory_space<vmem>>, vector<1x8x32xbf16>
    %38 = vector.shape_cast %37 : vector<1x8x32xbf16> to vector<8x32xbf16>
    %39 = vector.shape_cast %36 : vector<8x32xbf16> to vector<1x8x32xbf16>
    tpu.vector_store %arg6[%c0_15, %c0_16, %c0_17], %39 {strides = array<i32>} : memref<1x8x32xbf16, #tpu.memory_space<vmem>>, vector<1x8x32xbf16>,
    return
  }
  func.func @transform_0(%arg0: i32) -> (i32, i32, i32) {
    %c0_i32 = arith.constant 0 : i32
    %c0_i32_0 = arith.constant 0 : i32
    %c0_i32_1 = arith.constant 0 : i32
    return %arg0, %c0_i32, %c0_i32_0 : i32, i32, i32
  }
  func.func @transform_1(%arg0: i32) -> (i32, i32, i32) {
    %c0_i32 = arith.constant 0 : i32
    %c0_i32_0 = arith.constant 0 : i32
    %c0_i32_1 = arith.constant 0 : i32
    return %arg0, %c0_i32, %c0_i32_0 : i32, i32, i32
  }
  func.func @transform_2(%arg0: i32) -> (i32, i32) {
    %c0_i32 = arith.constant 0 : i32
    %c0_i32_0 = arith.constant 0 : i32
    %c0_i32_1 = arith.constant 0 : i32
    return %c0_i32, %c0_i32_0 : i32, i32
  }
  func.func @transform_3(%arg0: i32) -> (i32, i32) {
    %c0_i32 = arith.constant 0 : i32
    %c0_i32_0 = arith.constant 0 : i32
    %c0_i32_1 = arith.constant 0 : i32
    return %c0_i32, %c0_i32_0 : i32, i32
  }
  func.func @transform_4(%arg0: i32) -> (i32, i32) {
    %c0_i32 = arith.constant 0 : i32
    %c0_i32_0 = arith.constant 0 : i32
    %c0_i32_1 = arith.constant 0 : i32
    return %c0_i32, %c0_i32_0 : i32, i32
  }
  func.func @transform_5(%arg0: i32) -> (i32, i32, i32) {
    %c0_i32 = arith.constant 0 : i32
    %c0_i32_0 = arith.constant 0 : i32
    %c0_i32_1 = arith.constant 0 : i32
    return %arg0, %c0_i32, %c0_i32_0 : i32, i32, i32
  }
}

</mosaic_0001>

<llo_original>
// kernel: tpu_custom_call.1
$region0: #{tpu_custom_call.1}
  #allocation0 [shape = 'u32[]', space=smem, size = 0x4, offset = 0x4, fixed_abs, tag = 'smem constant byte address 0x4 - core index']
  #allocation1 [shape = 'u32[144,128]{1,0:T(1,128)}', space=vmem, size = 0x12000, scoped, tag = 'internal scratch']
  %s0 = inlined_call_operand.hbm [shape: bf16[2,8,32], index: 0, kind: input, shape index: {}]
  %s1 = inlined_call_operand.hbm [shape: bf16[2,8,32], index: 1, kind: input, shape index: {}]
  %s2 = inlined_call_operand.hbm [shape: bf16[8,32], index: 2, kind: input, shape index: {}]
  %s3 = inlined_call_operand.vmem [shape: f32[1,32], index: 3, kind: input, shape index: {}]
  %s4 = inlined_call_operand.vmem [shape: f32[1,32], index: 4, kind: input, shape index: {}]
  %s5 = inlined_call_operand.hbm [shape: bf16[2,8,32], index: 5, kind: output, shape index: {}]
  %s6 = sld [smem:[#allocation0]]
  $region65: #{tpu_custom_call.1} parent=0
    _
  %s8 = ssub.s32 1, %s6
  %s9 = scalar_select 0, %s8, %s6
  $region1: #{tpu_custom_call.1} parent=0
    #allocation2 [shape = 'u8[4096]{0}', space=vmem, size = 0x1000, scoped, tag = 'input window, operand 0']
    #allocation3 [shape = 's32[2]{0}', space=sflag, size = 0x8, scoped, tag = 'scoped memory for tpu_custom_call.1']
    #allocation4 [shape = 's32[2]{0}', space=sflag, size = 0x8, scoped, tag = 'scoped memory for tpu_custom_call.1']
    #allocation5 [shape = 'u8[4096]{0}', space=vmem, size = 0x1000, scoped, tag = 'input window, operand 1']
    #allocation6 [shape = 's32[2]{0}', space=sflag, size = 0x8, scoped, tag = 'scoped memory for tpu_custom_call.1']
    #allocation7 [shape = 'u8[2048]{0}', space=vmem, size = 0x800, scoped, tag = 'input window, operand 2, single buffered']
    #allocation8 [shape = 'u8[4096]{0}', space=vmem, size = 0x1000, scoped, tag = 'output window, operand 0']
    %10 = vsyncpa [#allocation3], 0
    %s11 = scalar_lea.sflag [#allocation3], 1
    %12 = vsyncpa %s11, 0
    %13 = vsyncpa [#allocation6], 0
    %s14 = scalar_lea.sflag [#allocation6], 1
    %15 = vsyncpa %s14, 0
    %16 = vsyncpa [#allocation4], 0
    %s17 = scalar_lea.sflag [#allocation4], 1
    %18 = vsyncpa %s17, 0
    loop: start=0, step=1, limit=4
    $region2: #{tpu_custom_call.1} parent=1 // loop_pre_header
      _
    $region3: #{tpu_custom_call.1} parent=1 // loop_header
      %s20 = sphi 0, %s24
      %p21 = scmp.ge.s32.totalorder %s20, 4
      %s30 = sphi 0, %s32
      %s33 = sphi 0, %s30
      %s34 = sphi 0, %s33
      %s50 = sphi 0, %s34
      %s56 = sphi 0, %s58
      %s59 = sphi 0, %s56
      %s60 = sphi 0, %s59
      %s76 = sphi 0, %s60
      %s80 = sphi 0, %s80
      %s82 = sphi 0, %s80
      %s83 = sphi 0, %s82
      %s97 = sphi 0, %s83
      %s101 = sphi 0, %s101
      %s103 = sphi 0, %s101
      %s104 = sphi 0, %s103
      %s118 = sphi 0, %s104
      %s122 = sphi 0, %s122
      %s124 = sphi 0, %s122
      %s125 = sphi 0, %s124
      %s139 = sphi 0, %s125
      %s145 = sphi 0, %s147
      %s148 = sphi 0, %s145
      %s149 = sphi 0, %s148
      %s165 = sphi 0, %s149
    $region4: #{tpu_custom_call.1} parent=1 // loop_header_branch
      %23 = sbr.rel (%p21) target = $region8
    $region5: #{tpu_custom_call.1} parent=1 // loop_body
      %s25 = ssub.s32 %s20, 1
      %s26 = ssub.s32 %s20, 2
      %s27 = sadd.s32 %s20, 1
      %s28 = ssub.s32 %s20, %s27
      %p29 = scmp.eq.s32.totalorder %s28, 0
      %s31 = sadd.s32 %s30, 1
      %s32 = scalar_select %p29, %s30, %s31
      %p35 = pneg %p29
      %p36 = scmp.eq.s32.totalorder %s20, 1
      %p37 = por %p35, %p36
      %p38 = scmp.ne.s32.totalorder %s30, %s33
      %p39 = scmp.eq.s32.totalorder %s20, 0
      %p40 = por %p38, %p39
      %p41 = scmp.ne.s32.totalorder %s30, %s33
      %p42 = scmp.eq.s32.totalorder %s25, 1
      %p43 = por %p41, %p42
      %p44 = scmp.ne.s32.totalorder %s33, %s34
      %p45 = scmp.eq.s32.totalorder %s25, 0
      %p46 = por %p44, %p45
      %p47 = scmp.ne.s32.totalorder %s33, %s34
      %p48 = scmp.eq.s32.totalorder %s26, 1
      %p49 = por %p47, %p48
      %p51 = scmp.ne.s32.totalorder %s34, %s50
      %p52 = scmp.eq.s32.totalorder %s26, 0
      %p53 = por %p51, %p52
      %s54 = ssub.s32 %s20, %s27
      %p55 = scmp.eq.s32.totalorder %s54, 0
      %s57 = sadd.s32 %s56, 1
      %s58 = scalar_select %p55, %s56, %s57
      %p61 = pneg %p55
      %p62 = scmp.eq.s32.totalorder %s20, 1
      %p63 = por %p61, %p62
      %p64 = scmp.ne.s32.totalorder %s56, %s59
      %p65 = scmp.eq.s32.totalorder %s20, 0
      %p66 = por %p64, %p65
      %p67 = scmp.ne.s32.totalorder %s56, %s59
      %p68 = scmp.eq.s32.totalorder %s25, 1
      %p69 = por %p67, %p68
      %p70 = scmp.ne.s32.totalorder %s59, %s60
      %p71 = scmp.eq.s32.totalorder %s25, 0
      %p72 = por %p70, %p71
      %p73 = scmp.ne.s32.totalorder %s59, %s60
      %p74 = scmp.eq.s32.totalorder %s26, 1
      %p75 = por %p73, %p74
      %p77 = scmp.ne.s32.totalorder %s60, %s76
      %p78 = scmp.eq.s32.totalorder %s26, 0
      %p79 = por %p77, %p78
      %s81 = sadd.s32 %s80, 1
      %p84 = scmp.eq.s32.totalorder %s20, 1
      %p85 = scmp.ne.s32.totalorder %s80, %s82
      %p86 = scmp.eq.s32.totalorder %s20, 0
      %p87 = por %p85, %p86
      %p88 = scmp.ne.s32.totalorder %s80, %s82
      %p89 = scmp.eq.s32.totalorder %s25, 1
      %p90 = por %p88, %p89
      %p91 = scmp.ne.s32.totalorder %s82, %s83
      %p92 = scmp.eq.s32.totalorder %s25, 0
      %p93 = por %p91, %p92
      %p94 = scmp.ne.s32.totalorder %s82, %s83
      %p95 = scmp.eq.s32.totalorder %s26, 1
      %p96 = por %p94, %p95
      %p98 = scmp.ne.s32.totalorder %s83, %s97
      %p99 = scmp.eq.s32.totalorder %s26, 0
      %p100 = por %p98, %p99
      %s102 = sadd.s32 %s101, 1
      %p105 = scmp.eq.s32.totalorder %s20, 1
      %p106 = scmp.ne.s32.totalorder %s101, %s103
      %p107 = scmp.eq.s32.totalorder %s20, 0
      %p108 = por %p106, %p107
      %p109 = scmp.ne.s32.totalorder %s101, %s103
      %p110 = scmp.eq.s32.totalorder %s25, 1
      %p111 = por %p109, %p110
      %p112 = scmp.ne.s32.totalorder %s103, %s104
      %p113 = scmp.eq.s32.totalorder %s25, 0
      %p114 = por %p112, %p113
      %p115 = scmp.ne.s32.totalorder %s103, %s104
      %p116 = scmp.eq.s32.totalorder %s26, 1
      %p117 = por %p115, %p116
      %p119 = scmp.ne.s32.totalorder %s104, %s118
      %p120 = scmp.eq.s32.totalorder %s26, 0
      %p121 = por %p119, %p120
      %s123 = sadd.s32 %s122, 1
      %p126 = scmp.eq.s32.totalorder %s20, 1
      %p127 = scmp.ne.s32.totalorder %s122, %s124
      %p128 = scmp.eq.s32.totalorder %s20, 0
      %p129 = por %p127, %p128
      %p130 = scmp.ne.s32.totalorder %s122, %s124
      %p131 = scmp.eq.s32.totalorder %s25, 1
      %p132 = por %p130, %p131
      %p133 = scmp.ne.s32.totalorder %s124, %s125
      %p134 = scmp.eq.s32.totalorder %s25, 0
      %p135 = por %p133, %p134
      %p136 = scmp.ne.s32.totalorder %s124, %s125
      %p137 = scmp.eq.s32.totalorder %s26, 1
      %p138 = por %p136, %p137
      %p140 = scmp.ne.s32.totalorder %s125, %s139
      %p141 = scmp.eq.s32.totalorder %s26, 0
      %p142 = por %p140, %p141
      %s143 = ssub.s32 %s20, %s27
      %p144 = scmp.eq.s32.totalorder %s143, 0
      %s146 = sadd.s32 %s145, 1
      %s147 = scalar_select %p144, %s145, %s146
      %p150 = pneg %p144
      %p151 = scmp.eq.s32.totalorder %s20, 1
      %p152 = por %p150, %p151
      %p153 = scmp.ne.s32.totalorder %s145, %s148
      %p154 = scmp.eq.s32.totalorder %s20, 0
      %p155 = por %p153, %p154
      %p156 = scmp.ne.s32.totalorder %s145, %s148
      %p157 = scmp.eq.s32.totalorder %s25, 1
      %p158 = por %p156, %p157
      %p159 = scmp.ne.s32.totalorder %s148, %s149
      %p160 = scmp.eq.s32.totalorder %s25, 0
      %p161 = por %p159, %p160
      %p162 = scmp.ne.s32.totalorder %s148, %s149
      %p163 = scmp.eq.s32.totalorder %s26, 1
      %p164 = por %p162, %p163
      %p166 = scmp.ne.s32.totalorder %s149, %s165
      %p167 = scmp.eq.s32.totalorder %s26, 0
      %p168 = por %p166, %p167
      %p169 = scmp.le.s32.totalorder 1, %s20
      %p170 = scmp.lt.s32.totalorder %s20, 3
      %p171 = pnand %p169, %p170
      %p172 = pneg %p171
      // Predicated region
      $region9: #{tpu_custom_call.1} parent=5 // pred_check
        _
      $region10: #{tpu_custom_call.1} parent=5 // pred_check_branch
        %174 = sbr.rel (%p171) target = $region12
      $region11: #{tpu_custom_call.1} parent=5 // pred_region
        %s175 = ssub.s32 %s20, 1
        // Predicated region
        $region13: #{tpu_custom_call.1} parent=11 // pred_check
          %p176 = pneg %p93
        $region14: #{tpu_custom_call.1} parent=11 // pred_check_branch
          %178 = sbr.rel (%p176) target = $region16
        $region15: #{tpu_custom_call.1} parent=11 // pred_region
          %s180 = ssub.s32 64, 64
          %181 = vsyncadd [#allocation6], %s180
          %s183 = sshll.u32 [#allocation7], 4
          %s184 = int_to_ptr.vmem [resolvable:$true] %s183
          %186 = dma.hbm_to_vmem [thread:$0]  %s2, 64, %s184, [#allocation6]
        $region16: #{tpu_custom_call.1} parent=11 // pred_fallthru
          _
        // Predicated region
        $region17: #{tpu_custom_call.1} parent=11 // pred_check
          %p187 = pneg %p114
        $region18: #{tpu_custom_call.1} parent=11 // pred_check_branch
          %189 = sbr.rel (%p187) target = $region20
        $region19: #{tpu_custom_call.1} parent=11 // pred_region
          _
        $region20: #{tpu_custom_call.1} parent=11 // pred_fallthru
          _
        // Predicated region
        $region21: #{tpu_custom_call.1} parent=11 // pred_check
          %p190 = pneg %p135
        $region22: #{tpu_custom_call.1} parent=11 // pred_check_branch
          %192 = sbr.rel (%p190) target = $region24
        $region23: #{tpu_custom_call.1} parent=11 // pred_region
          _
        $region24: #{tpu_custom_call.1} parent=11 // pred_fallthru
          _
      $region12: #{tpu_custom_call.1} parent=5 // pred_fallthru
        _
      %p193 = scmp.lt.s32.totalorder %s20, 2
      // Predicated region
      $region25: #{tpu_custom_call.1} parent=5 // pred_check
        %p194 = pneg %p193
      $region26: #{tpu_custom_call.1} parent=5 // pred_check_branch
        %196 = sbr.rel (%p194) target = $region28
      $region27: #{tpu_custom_call.1} parent=5 // pred_region
        // Predicated region
        $region29: #{tpu_custom_call.1} parent=27 // pred_check
          %p197 = pneg %p40
        $region30: #{tpu_custom_call.1} parent=27 // pred_check_branch
          %199 = sbr.rel (%p197) target = $region32
        $region31: #{tpu_custom_call.1} parent=27 // pred_region
          %s200 = sand.u32 %s30, 1
          %s201 = scalar_lea.sflag [#allocation3], %s200
          %s202 = sand.u32 %s30, 1
          %s203 = smul.addr %s202, 4
          %s204 = scalar_lea.vmem [#allocation2], %s203
          %s206 = ssub.s32 64, 64
          %207 = vsyncadd %s201, %s206
          %s208 = smul.addr %s20, 64
          %s209 = scalar_lea.hbm %s0, %s208
          %s211 = sshll.u32 %s204, 4
          %s212 = int_to_ptr.vmem [resolvable:$true] %s211
          %214 = dma.hbm_to_vmem [thread:$0]  %s209, 64, %s212, %s201
        $region32: #{tpu_custom_call.1} parent=27 // pred_fallthru
          _
        // Predicated region
        $region33: #{tpu_custom_call.1} parent=27 // pred_check
          %p215 = pneg %p66
        $region34: #{tpu_custom_call.1} parent=27 // pred_check_branch
          %217 = sbr.rel (%p215) target = $region36
        $region35: #{tpu_custom_call.1} parent=27 // pred_region
          %s218 = sand.u32 %s20, 1
          %s219 = scalar_lea.sflag [#allocation6], %s218
          %s220 = sand.u32 %s56, 1
          %s221 = smul.addr %s220, 4
          %s222 = scalar_lea.vmem [#allocation5], %s221
          %s224 = ssub.s32 64, 64
          %225 = vsyncadd %s219, %s224
          %s226 = smul.addr %s20, 64
          %s227 = scalar_lea.hbm %s1, %s226
          %s229 = sshll.u32 %s222, 4
          %s230 = int_to_ptr.vmem [resolvable:$true] %s229
          %232 = dma.hbm_to_vmem [thread:$0]  %s227, 64, %s230, %s219
        $region36: #{tpu_custom_call.1} parent=27 // pred_fallthru
          _
      $region28: #{tpu_custom_call.1} parent=5 // pred_fallthru
        _
      %p233 = scmp.le.s32.totalorder 1, %s20
      %p234 = scmp.lt.s32.totalorder %s20, 3
      %p235 = pnand %p233, %p234
      %p236 = pneg %p235
      // Predicated region
      $region37: #{tpu_custom_call.1} parent=5 // pred_check
        _
      $region38: #{tpu_custom_call.1} parent=5 // pred_check_branch
        %238 = sbr.rel (%p235) target = $region40
      $region39: #{tpu_custom_call.1} parent=5 // pred_region
        %s239 = ssub.s32 %s20, 1
        %s240 = sand.u32 %s33, 1
        %s241 = scalar_lea.sflag [#allocation3], %s240
        %s242 = sand.u32 %s33, 1
        %s243 = smul.addr %s242, 4
        %s244 = scalar_lea.vmem [#allocation2], %s243
        // Predicated region
        $region41: #{tpu_custom_call.1} parent=39 // pred_check
          %p245 = pneg %p46
        $region42: #{tpu_custom_call.1} parent=39 // pred_check_branch
          %247 = sbr.rel (%p245) target = $region44
        $region43: #{tpu_custom_call.1} parent=39 // pred_region
          %248 = dma.done %s241, 64
        $region44: #{tpu_custom_call.1} parent=39 // pred_fallthru
          _
        %s249 = sand.u32 %s25, 1
        %s250 = scalar_lea.sflag [#allocation6], %s249
        %s251 = sand.u32 %s59, 1
        %s252 = smul.addr %s251, 4
        %s253 = scalar_lea.vmem [#allocation5], %s252
        // Predicated region
        $region45: #{tpu_custom_call.1} parent=39 // pred_check
          %p254 = pneg %p72
        $region46: #{tpu_custom_call.1} parent=39 // pred_check_branch
          %256 = sbr.rel (%p254) target = $region48
        $region47: #{tpu_custom_call.1} parent=39 // pred_region
          %257 = dma.done %s250, 64
        $region48: #{tpu_custom_call.1} parent=39 // pred_fallthru
          _
        // Predicated region
        $region49: #{tpu_custom_call.1} parent=39 // pred_check
          %p258 = pneg %p93
        $region50: #{tpu_custom_call.1} parent=39 // pred_check_branch
          %260 = sbr.rel (%p258) target = $region52
        $region51: #{tpu_custom_call.1} parent=39 // pred_region
          %261 = dma.done [#allocation6], 64
        $region52: #{tpu_custom_call.1} parent=39 // pred_fallthru
          _
        %s262 = sand.u32 %s33, 1
        %s263 = scalar_lea.sflag [#allocation3], %s262
        %s264 = sand.u32 %s33, 1
        %s265 = smul.addr %s264, 4
        %s266 = scalar_lea.vmem [#allocation2], %s265
        %p267 = pneg %p46
        %p268 = pneg %p43
        %s269 = sand.u32 %s25, 1
        %s270 = scalar_lea.sflag [#allocation6], %s269
        %s271 = sand.u32 %s59, 1
        %s272 = smul.addr %s271, 4
        %s273 = scalar_lea.vmem [#allocation5], %s272
        %p274 = pneg %p72
        %p275 = pneg %p69
        %p276 = pneg %p93
        %p277 = pneg %p90
        %p278 = pneg %p114
        %p279 = pneg %p111
        %p280 = pneg %p135
        %p281 = pneg %p132
        %p282 = pneg %p161
        %p283 = pneg %p158
        %s284 = sand.u32 %s148, 1
        %s285 = scalar_lea.sflag [#allocation4], %s284
        %s286 = sand.u32 %s148, 1
        %s287 = smul.addr %s286, 4
        %s288 = scalar_lea.vmem [#allocation8], %s287
        %v289 = vld [vmem:[%s244] sm:$0xf]
        %v290 = vunpack.c.l.bf16 %v289
        %v291 = vld [vmem:[%s253] sm:$0xf]
        %v292 = vunpack.c.l.bf16 %v291
        %v293 = vadd.f32 %v290, %v292
        %v294 = vld [vmem:[#allocation7] sm:$0xf]
        %v295 = vunpack.c.l.bf16 %v294
        %v296 = vadd.f32 %v293, %v295
        %vm297 = vcmask 261120
        %v298 = vsel %vm297, %v296, 0.0
        %299 = vadd.xlane.f32.xlu0 %v298
        %v300 = vpop.xlane.xlu0 %299
        %v301 = vrcp.pop 32.0
        %v302 = vmul.f32 %v300, %v301
        %v303 = vsub.f32 %v296, %v302
        %v304 = vmul.f32 %v303, %v303
        %v305 = vsel %vm297, %v304, 0.0
        %306 = vadd.xlane.f32.xlu0 %v305
        %v307 = vpop.xlane.xlu0 %306
        %v308 = vmul.f32 %v307, %v301
        %v309 = vadd.f32 %v308, 1e-12
        %v310 = vrsqrt.pop %v309
        %v311 = vmul.f32 %v303, %v310
        %v312 = vld [vmem:[%s3] sm:$0x1]
        %v314 = vlaneseq
        %v315 = vshrl.u32 %v314, 7
        %v316 = vsub.s32 0, %v315
        %v317 = vrot.slane %v312, %v316
        %v319 = vmul.f32 %v311, %v317
        %v320 = vld [vmem:[%s4] sm:$0x1]
        %v322 = vlaneseq
        %v323 = vshrl.u32 %v322, 7
        %v324 = vsub.s32 0, %v323
        %v325 = vrot.slane %v320, %v324
        %v327 = vadd.f32 %v319, %v325
        %v328 = vpack.c.bf16 %v327, %v327
        %vm329 = vcmask 257024
        %330 = vst.msk [vmem:[%s288] sm:$0xf] %vm329, %v328
        %s331 = sand.u32 %s148, 1
        %s332 = scalar_lea.sflag [#allocation4], %s331
        %s333 = sand.u32 %s148, 1
        %s334 = smul.addr %s333, 4
        %s335 = scalar_lea.vmem [#allocation8], %s334
        // Predicated region
        $region53: #{tpu_custom_call.1} parent=39 // pred_check
          %p336 = pneg %p158
        $region54: #{tpu_custom_call.1} parent=39 // pred_check_branch
          %338 = sbr.rel (%p336) target = $region56
        $region55: #{tpu_custom_call.1} parent=39 // pred_region
          %s340 = ssub.s32 64, 64
          %341 = vsyncadd %s332, %s340
          %s342 = smul.addr %s25, 64
          %s343 = scalar_lea.hbm %s5, %s342
          %s345 = sshll.u32 %s335, 4
          %s346 = int_to_ptr.vmem [resolvable:$true] %s345
          %348 = dma.vmem_to_hbm [thread:$0]  %s346, 64, %s343, %s332
        $region56: #{tpu_custom_call.1} parent=39 // pred_fallthru
          _
      $region40: #{tpu_custom_call.1} parent=5 // pred_fallthru
        _
      %p349 = scmp.le.s32.totalorder 2, %s20
      // Predicated region
      $region57: #{tpu_custom_call.1} parent=5 // pred_check
        %p350 = pneg %p349
      $region58: #{tpu_custom_call.1} parent=5 // pred_check_branch
        %352 = sbr.rel (%p350) target = $region60
      $region59: #{tpu_custom_call.1} parent=5 // pred_region
        %s353 = ssub.s32 %s20, 2
        // Predicated region
        $region61: #{tpu_custom_call.1} parent=59 // pred_check
          %p354 = pneg %p164
        $region62: #{tpu_custom_call.1} parent=59 // pred_check_branch
          %356 = sbr.rel (%p354) target = $region64
        $region63: #{tpu_custom_call.1} parent=59 // pred_region
          %s357 = sand.u32 %s149, 1
          %s358 = scalar_lea.sflag [#allocation4], %s357
          %s359 = sand.u32 %s149, 1
          %s360 = smul.addr %s359, 4
          %s361 = scalar_lea.vmem [#allocation8], %s360
          %362 = dma.done %s358, 64
        $region64: #{tpu_custom_call.1} parent=59 // pred_fallthru
          _
      $region60: #{tpu_custom_call.1} parent=5 // pred_fallthru
        _
    $region6: #{tpu_custom_call.1} parent=1 // loop_footer
      %s24 = sadd.s32 1, %s20
    $region7: #{tpu_custom_call.1} parent=1 // loop_footer_branch
      %19 = sbr.rel target = $region3
    $region8: #{tpu_custom_call.1} parent=1 // loop_exit
      _
    %363 = vsyncpa [#allocation3], 1
    %s364 = scalar_lea.sflag [#allocation3], 1
    %365 = vsyncpa %s364, 1
    %366 = vsyncpa [#allocation6], 1
    %s367 = scalar_lea.sflag [#allocation6], 1
    %368 = vsyncpa %s367, 1
    %369 = vsyncpa [#allocation4], 1
    %s370 = scalar_lea.sflag [#allocation4], 1
    %371 = vsyncpa %s370, 1

</llo_original>
